<compile_context>
chip_gen: v7x
topology: tpu7x:2x2x1
jax: 0.10.0
libtpu: 0.0.40
codegen_flags: <defaults>
</compile_context>

<pallas_src>
import functools

import numpy as np
import jax
import jax.numpy as jnp
from jax.experimental import pallas as pl
from jax.experimental.pallas import tpu as pltpu

# Static dimensions implied by MetaNet.
S_IN, F_IN = 8, 5            # input m: (B, 8, 5)
H1, C1 = 32, 7               # net1: Linear(5,32) -> Tanh -> Linear(32,7)
H2, C2 = 16, 1               # net2: Linear(8,16) -> Tanh -> Linear(16,1)
D_IN = S_IN * F_IN           # 40   flattened input features, order (s, i)
D_H1 = S_IN * H1             # 256  hidden-1 rows, order (s, o)
D_H2 = C1 * H2               # 112  hidden-2 rows, order (c, k)
D_OUT = 8                    # 7 real output rows, padded to 8 sublanes


# ----------------------------------------------------------------------------
# Pallas kernel: 3 bf16 MXU matmuls (f32 accumulate) + 2 tanh, lane-dense.
# ----------------------------------------------------------------------------
def _meta_net_kernel(x_ref, wa_ref, ba_ref, wb_ref, bb_ref, wc_ref, bc_ref,
                     o_ref, *, bf16_eltwise):
    act_dt = jnp.bfloat16 if bf16_eltwise else jnp.float32

    x = x_ref[...]                               # (TB, 40) f32
    xt = x.T.astype(jnp.bfloat16)                # (40, TB)  XLU transpose + cast

    h1 = jnp.tanh(
        (jnp.dot(wa_ref[...], xt, preferred_element_type=jnp.float32)
         + ba_ref[...]).astype(act_dt)
    ).astype(jnp.bfloat16)                       # (256, TB)

    h2 = jnp.tanh(
        (jnp.dot(wb_ref[...], h1, preferred_element_type=jnp.float32)
         + bb_ref[...]).astype(act_dt)
    ).astype(jnp.bfloat16)                       # (112, TB)

    o_ref[...] = (
        jnp.dot(wc_ref[...], h2, preferred_element_type=jnp.float32)
        + bc_ref[...])                           # (8, TB) f32, full-lane store


# ----------------------------------------------------------------------------
# Weight packing (call ONCE, reuse across forward calls).
# ----------------------------------------------------------------------------
def _round_up(n, m):
    return (n + m - 1) // m * m


def pack_params(params):
    """Fold the per-position/per-channel Linears (and the transpose_) into
    three block-structured matrices; cast weights to bf16 for the MXU."""
    W1a, b1a, W1b, b1b, W2a, b2a, W2b, b2b = [
        jnp.asarray(p, jnp.float32) for p in params]

    eye_s = jnp.eye(S_IN, dtype=jnp.float32)
    eye_c = jnp.eye(C1, dtype=jnp.float32)

    # Layer A: net1's Linear(5,32) applied at each of the 8 positions.
    wa = jnp.kron(eye_s, W1a)                              # (256, 40) rows (s,o)
    ba = jnp.tile(b1a, S_IN).reshape(D_H1, 1)              # (256, 1)

    # net1's Linear(32,7); kron rows come out (s,c) -> permute to (c,s).
    # This static row permutation IS the module's transpose_(1, 2).
    perm = np.arange(S_IN * C1).reshape(S_IN, C1).T.reshape(-1)
    w1b_p = jnp.kron(eye_s, W1b)[perm]                     # (56, 256) rows (c,s)
    b1b_p = jnp.repeat(b1b, S_IN).reshape(C1 * S_IN, 1)    # (56, 1)

    # net2's Linear(8,16) applied at each of the 7 channels.
    w2a_bd = jnp.kron(eye_c, W2a)                          # (112, 56) rows (c,k)
    b2a_bd = jnp.tile(b2a, C1).reshape(D_H2, 1)            # (112, 1)

    # Layer B: Linear(32,7) and Linear(8,16) have no nonlinearity in between,
    # so compose them into a single matmul (also removes one intermediate).
    wb = w2a_bd @ w1b_p                                    # (112, 256)
    bb = w2a_bd @ b1b_p + b2a_bd                           # (112, 1)

    # Layer C: net2's Linear(16,1) per channel; pad 7 -> 8 rows (sublane-clean).
    wc = jnp.kron(eye_c, W2b)                              # (7, 112)
    wc = jnp.concatenate(
        [wc, jnp.zeros((D_OUT - C1, D_H2), jnp.float32)], axis=0)       # (8, 112)
    bc = jnp.concatenate(
        [jnp.tile(b2b, C1), jnp.zeros((D_OUT - C1,), jnp.float32)]
    ).reshape(D_OUT, 1)                                    # (8, 1)

    return (wa.astype(jnp.bfloat16), ba,
            wb.astype(jnp.bfloat16), bb,
            wc.astype(jnp.bfloat16), bc)


def _default_bf16_eltwise():
    """bf16 tanh/bias only on generations with bf16 VPU/EUP (v6e, v7x, ...)."""
    try:
        kind = jax.devices()[0].device_kind.lower()
    except Exception:
        return False
    return not any(tag in kind for tag in ("v2", "v3", "v4", "v5"))


# ----------------------------------------------------------------------------
# Forward wrapper.
# ----------------------------------------------------------------------------
def meta_net_forward(m, packed, *, tb=None, bf16_eltwise=None,
                     vmem_limit_bytes=48 * 1024 * 1024):
    B = m.shape[0]
    assert m.shape[1:] == (S_IN, F_IN), m.shape

    if bf16_eltwise is None:
        bf16_eltwise = _default_bf16_eltwise()

    if tb is None:
        tb = min(4096, _round_up(B, 128))
        if B > 128:
            # >= 2 grid steps so the "parallel" axis splits across both v7x TCs.
            tb = min(tb, _round_up(pl.cdiv(B, 2), 128))
    assert tb % 128 == 0, tb
    bp = _round_up(B, tb)

    wa, ba, wb, bb, wc, bc = packed

    # Batch-major, contiguous input tile; the transpose happens in-kernel.
    x = m.reshape(B, D_IN).astype(jnp.float32)             # (B, 40), rows (s, i)
    if bp != B:
        x = jnp.pad(x, ((0, bp - B), (0, 0)))

    def resident(shape):
        # Whole-array block, same index every grid step -> stays in VMEM.
        return pl.BlockSpec(shape, lambda i: (0, 0))

    out = pl.pallas_call(
        functools.partial(_meta_net_kernel, bf16_eltwise=bf16_eltwise),
        out_shape=jax.ShapeDtypeStruct((D_OUT, bp), jnp.float32),
        grid=(bp // tb,),
        in_specs=[
            pl.BlockSpec((tb, D_IN), lambda i: (i, 0)),    # input batch tile
            resident((D_H1, D_IN)), resident((D_H1, 1)),   # layer A (net1 L1)
            resident((D_H2, D_H1)), resident((D_H2, 1)),   # layer B (net1 L2 ∘ net2 L1)
            resident((D_OUT, D_H2)), resident((D_OUT, 1)), # layer C (net2 L2)
        ],
        out_specs=pl.BlockSpec((D_OUT, tb), lambda i: (0, i)),
        compiler_params=pltpu.CompilerParams(
            dimension_semantics=("parallel",),
            vmem_limit_bytes=vmem_limit_bytes),
    )(x, wa, ba, wb, bb, wc, bc)

    return out[:C1, :B].T                                  # (B, 7)


# ----------------------------------------------------------------------------
# Pure-JAX reference mirroring the PyTorch module exactly (f32 everywhere).
# ----------------------------------------------------------------------------
def _ref_forward(m, params):
    W1a, b1a, W1b, b1b, W2a, b2a, W2b, b2b = params
    h = jnp.tanh(m @ W1a.T + b1a)            # (B, 8, 32)
    y = h @ W1b.T + b1b                      # (B, 8, 7)
    t = jnp.swapaxes(y, 1, 2)                # (B, 7, 8)   == m.transpose_(1, 2)
    h2 = jnp.tanh(t @ W2a.T + b2a)           # (B, 7, 16)
    y2 = h2 @ W2b.T + b2b                    # (B, 7, 1)
    return y2.reshape(m.shape[0], -1)        # Flatten(start_dim=1) -> (B, 7)


# ----------------------------------------------------------------------------
# Deterministic PyTorch-style init: uniform +-1/sqrt(fan_in).
# ----------------------------------------------------------------------------
def init_params(key):
    keys = jax.random.split(key, 8)

    def lin(kw, kb, out_f, in_f):
        bound = 1.0 / float(np.sqrt(in_f))
        W = jax.random.uniform(kw, (out_f, in_f), jnp.float32, -bound, bound)
        b = jax.random.uniform(kb, (out_f,), jnp.float32, -bound, bound)
        return W, b

    W1a, b1a = lin(keys[0], keys[1], H1, F_IN)   # Linear(5, 32)
    W1b, b1b = lin(keys[2], keys[3], C1, H1)     # Linear(32, 7)
    W2a, b2a = lin(keys[4], keys[5], H2, S_IN)   # Linear(8, 16)
    W2b, b2b = lin(keys[6], keys[7], C2, H2)     # Linear(16, 1)
    return (W1a, b1a, W1b, b1b, W2a, b2a, W2b, b2b)


if __name__ == "__main__":
    key = jax.random.PRNGKey(0)
    pkey, xkey1, xkey2 = jax.random.split(key, 3)
    params = init_params(pkey)

    # Pack (kron / permute / compose / bf16 cast) ONCE, outside the call path.
    packed = pack_params(params)
    fwd = jax.jit(meta_net_forward)

    # Small primary case (B=2) plus a multi-tile case exercising padding + grid>1.
    for B, xkey in ((2, xkey1), (384, xkey2)):
        m = jax.random.normal(xkey, (B, S_IN, F_IN), jnp.float32)
        out = jax.block_until_ready(fwd(m, packed))
        ref = _ref_forward(m, params)
        assert out.shape == (B, C1), out.shape
        # bf16 MXU path -> loosened tolerance vs the f32 reference.
        assert jnp.allclose(out, ref, atol=5e-2, rtol=5e-2), (
            "mismatch vs JAX reference: max abs err "
            f"{float(jnp.max(jnp.abs(out - ref)))}")

    print("KERNEL_OK")
</pallas_src>

<mosaic_0001>
module attributes {stable_mosaic.version = 11 : i64} {
  func.func @_meta_net_kernel(%arg0: i32, %arg1: memref<128x40xf32, #tpu.memory_space<vmem>>, %arg2: memref<256x40xbf16, #tpu.memory_space<vmem>>, %arg3: memref<256x1xf32, #tpu.memory_space<vmem>>, %arg4: memref<112x256xbf16, #tpu.memory_space<vmem>>, %arg5: memref<112x1xf32, #tpu.memory_space<vmem>>, %arg6: memref<8x112xbf16, #tpu.memory_space<vmem>>, %arg7: memref<8x1xf32, #tpu.memory_space<vmem>>, %arg8: memref<8x128xf32, #tpu.memory_space<vmem>>) attributes {dimension_semantics = [#tpu.dimension_semantics<parallel>], iteration_bounds = array<i64: 1>, scalar_prefetch = 0 : i64, scratch_operands = 0 : i64, tpu.core_type = #tpu.core_type<tc>, window_params = [{transform_indices = @transform_0, window_bounds = array<i64: 128, 40>}, {pipeline_mode = #tpu.pipeline_mode<synchronous>, transform_indices = @transform_1, window_bounds = array<i64: 256, 40>}, {pipeline_mode = #tpu.pipeline_mode<synchronous>, transform_indices = @transform_2, window_bounds = array<i64: 256, 1>}, {pipeline_mode = #tpu.pipeline_mode<synchronous>, transform_indices = @transform_3, window_bounds = array<i64: 112, 256>}, {pipeline_mode = #tpu.pipeline_mode<synchronous>, transform_indices = @transform_4, window_bounds = array<i64: 112, 1>}, {pipeline_mode = #tpu.pipeline_mode<synchronous>, transform_indices = @transform_5, window_bounds = array<i64: 8, 112>}, {pipeline_mode = #tpu.pipeline_mode<synchronous>, transform_indices = @transform_6, window_bounds = array<i64: 8, 1>}, {transform_indices = @transform_7, window_bounds = array<i64: 8, 128>}]} {
    %c0 = arith.constant 0 : index
    %c0_0 = arith.constant 0 : index
    %0 = vector.load %arg1[%c0, %c0_0] : memref<128x40xf32, #tpu.memory_space<vmem>>, vector<128x40xf32>
    %1 = tpu.transpose %0, [1, 0] : vector<128x40xf32> -> vector<40x128xf32>
    %2 = arith.truncf %1 : vector<40x128xf32> to vector<40x128xbf16>
    %c0_1 = arith.constant 0 : index
    %c0_2 = arith.constant 0 : index
    %3 = vector.load %arg2[%c0_1, %c0_2] : memref<256x40xbf16, #tpu.memory_space<vmem>>, vector<256x40xbf16>
    %cst = arith.constant dense<0.000000e+00> : vector<256x128xf32>
    %4 = tpu.matmul %3, %2, %cst {dimension_numbers = #tpu.dot_dimension_numbers<[1], [0], [0], [1], [0, 0, 1, 1], [], []>} : vector<256x40xbf16>, vector<40x128xbf16>, vector<256x128xf32> -> vector<256x128xf32>
    %c0_3 = arith.constant 0 : index
    %c0_4 = arith.constant 0 : index
    %5 = vector.load %arg3[%c0_3, %c0_4] : memref<256x1xf32, #tpu.memory_space<vmem>>, vector<256x1xf32>
    %6 = vector.broadcast %5 : vector<256x1xf32> to vector<256x128xf32>
    %7 = arith.addf %4, %6 : vector<256x128xf32>
    %8 = arith.truncf %7 : vector<256x128xf32> to vector<256x128xbf16>
    %9 = math.tanh %8 : vector<256x128xbf16>
    %c0_5 = arith.constant 0 : index
    %c0_6 = arith.constant 0 : index
    %10 = vector.load %arg4[%c0_5, %c0_6] : memref<112x256xbf16, #tpu.memory_space<vmem>>, vector<112x256xbf16>
    %cst_7 = arith.constant dense<0.000000e+00> : vector<112x128xf32>
    %11 = tpu.matmul %10, %9, %cst_7 {dimension_numbers = #tpu.dot_dimension_numbers<[1], [0], [0], [1], [0, 0, 1, 1], [], []>} : vector<112x256xbf16>, vector<256x128xbf16>, vector<112x128xf32> -> vector<112x128xf32>
    %c0_8 = arith.constant 0 : index
    %c0_9 = arith.constant 0 : index
    %12 = vector.load %arg5[%c0_8, %c0_9] : memref<112x1xf32, #tpu.memory_space<vmem>>, vector<112x1xf32>
    %13 = vector.broadcast %12 : vector<112x1xf32> to vector<112x128xf32>
    %14 = arith.addf %11, %13 : vector<112x128xf32>
    %15 = arith.truncf %14 : vector<112x128xf32> to vector<112x128xbf16>
    %16 = math.tanh %15 : vector<112x128xbf16>
    %c0_10 = arith.constant 0 : index
    %c0_11 = arith.constant 0 : index
    %17 = vector.load %arg6[%c0_10, %c0_11] : memref<8x112xbf16, #tpu.memory_space<vmem>>, vector<8x112xbf16>
    %cst_12 = arith.constant dense<0.000000e+00> : vector<8x128xf32>
    %18 = tpu.matmul %17, %16, %cst_12 {dimension_numbers = #tpu.dot_dimension_numbers<[1], [0], [0], [1], [0, 0, 1, 1], [], []>} : vector<8x112xbf16>, vector<112x128xbf16>, vector<8x128xf32> -> vector<8x128xf32>
    %c0_13 = arith.constant 0 : index
    %c0_14 = arith.constant 0 : index
    %19 = vector.load %arg7[%c0_13, %c0_14] : memref<8x1xf32, #tpu.memory_space<vmem>>, vector<8x1xf32>
    %20 = vector.broadcast %19 : vector<8x1xf32> to vector<8x128xf32>
    %21 = arith.addf %18, %20 : vector<8x128xf32>
    %c0_15 = arith.constant 0 : index
    %c0_16 = arith.constant 0 : index
    %22 = vector.load %arg8[%c0_15, %c0_16] : memref<8x128xf32, #tpu.memory_space<vmem>>, vector<8x128xf32>
    tpu.vector_store %arg8[%c0_15, %c0_16], %21 {strides = array<i32>} : memref<8x128xf32, #tpu.memory_space<vmem>>, vector<8x128xf32>,
    return
  }
  func.func @transform_0(%arg0: i32) -> (i32, i32) {
    %c0_i32 = arith.constant 0 : i32
    %c0_i32_0 = arith.constant 0 : i32
    return %arg0, %c0_i32 : i32, i32
  }
  func.func @transform_1(%arg0: i32) -> (i32, i32) {
    %c0_i32 = arith.constant 0 : i32
    %c0_i32_0 = arith.constant 0 : i32
    %c0_i32_1 = arith.constant 0 : i32
    return %c0_i32, %c0_i32_0 : i32, i32
  }
  func.func @transform_2(%arg0: i32) -> (i32, i32) {
    %c0_i32 = arith.constant 0 : i32
    %c0_i32_0 = arith.constant 0 : i32
    %c0_i32_1 = arith.constant 0 : i32
    return %c0_i32, %c0_i32_0 : i32, i32
  }
  func.func @transform_3(%arg0: i32) -> (i32, i32) {
    %c0_i32 = arith.constant 0 : i32
    %c0_i32_0 = arith.constant 0 : i32
    %c0_i32_1 = arith.constant 0 : i32
    return %c0_i32, %c0_i32_0 : i32, i32
  }
  func.func @transform_4(%arg0: i32) -> (i32, i32) {
    %c0_i32 = arith.constant 0 : i32
    %c0_i32_0 = arith.constant 0 : i32
    %c0_i32_1 = arith.constant 0 : i32
    return %c0_i32, %c0_i32_0 : i32, i32
  }
  func.func @transform_5(%arg0: i32) -> (i32, i32) {
    %c0_i32 = arith.constant 0 : i32
    %c0_i32_0 = arith.constant 0 : i32
    %c0_i32_1 = arith.constant 0 : i32
    return %c0_i32, %c0_i32_0 : i32, i32
  }
  func.func @transform_6(%arg0: i32) -> (i32, i32) {
    %c0_i32 = arith.constant 0 : i32
    %c0_i32_0 = arith.constant 0 : i32
    %c0_i32_1 = arith.constant 0 : i32
    return %c0_i32, %c0_i32_0 : i32, i32
  }
  func.func @transform_7(%arg0: i32) -> (i32, i32) {
    %c0_i32 = arith.constant 0 : i32
    %c0_i32_0 = arith.constant 0 : i32
    return %c0_i32, %arg0 : i32, i32
  }
}

</mosaic_0001>

<llo_original>
// kernel: meta_net_forward.1
$region0: #{meta_net_forward.1}
  #allocation0 [shape = 'u32[]', space=smem, size = 0x4, offset = 0x4, fixed_abs, tag = 'smem constant byte address 0x4 - core index']
  #allocation1 [shape = 'u32[144,128]{1,0:T(1,128)}', space=vmem, size = 0x12000, scoped, tag = 'internal scratch']
  %s0 = inlined_call_operand.vmem [shape: f32[128,40], index: 0, kind: input, shape index: {}]
  %s1 = inlined_call_operand.vmem [shape: bf16[256,40], index: 1, kind: input, shape index: {}]
  %s2 = inlined_call_operand.vmem [shape: f32[256,1], index: 2, kind: input, shape index: {}]
  %s3 = inlined_call_operand.vmem [shape: bf16[112,256], index: 3, kind: input, shape index: {}]
  %s4 = inlined_call_operand.vmem [shape: f32[112,1], index: 4, kind: input, shape index: {}]
  %s5 = inlined_call_operand.vmem [shape: bf16[8,112], index: 5, kind: input, shape index: {}]
  %s6 = inlined_call_operand.vmem [shape: f32[8,1], index: 6, kind: input, shape index: {}]
  %s7 = inlined_call_operand.vmem [shape: f32[8,128], index: 7, kind: output, shape index: {}]
  %s8 = sld [smem:[#allocation0]]
  $region38: #{meta_net_forward.1} parent=0
    _
  %s10 = ssub.s32 1, %s8
  %s11 = scalar_select 0, %s10, %s8
  // Predicated region
  $region2: #{meta_net_forward.1} parent=0 // pred_check
    _
  $region3: #{meta_net_forward.1} parent=0 // pred_check_branch
    %13 = sbr.rel (0) target = $region5
  $region4: #{meta_net_forward.1} parent=0 // pred_region
    _
  $region5: #{meta_net_forward.1} parent=0 // pred_fallthru
    _
  // Predicated region
  $region6: #{meta_net_forward.1} parent=0 // pred_check
    _
  $region7: #{meta_net_forward.1} parent=0 // pred_check_branch
    %15 = sbr.rel (0) target = $region9
  $region8: #{meta_net_forward.1} parent=0 // pred_region
    _
  $region9: #{meta_net_forward.1} parent=0 // pred_fallthru
    _
  // Predicated region
  $region10: #{meta_net_forward.1} parent=0 // pred_check
    _
  $region11: #{meta_net_forward.1} parent=0 // pred_check_branch
    %17 = sbr.rel (0) target = $region13
  $region12: #{meta_net_forward.1} parent=0 // pred_region
    _
  $region13: #{meta_net_forward.1} parent=0 // pred_fallthru
    _
  // Predicated region
  $region14: #{meta_net_forward.1} parent=0 // pred_check
    _
  $region15: #{meta_net_forward.1} parent=0 // pred_check_branch
    %19 = sbr.rel (0) target = $region17
  $region16: #{meta_net_forward.1} parent=0 // pred_region
    _
  $region17: #{meta_net_forward.1} parent=0 // pred_fallthru
    _
  // Predicated region
  $region18: #{meta_net_forward.1} parent=0 // pred_check
    _
  $region19: #{meta_net_forward.1} parent=0 // pred_check_branch
    %21 = sbr.rel (0) target = $region21
  $region20: #{meta_net_forward.1} parent=0 // pred_region
    _
  $region21: #{meta_net_forward.1} parent=0 // pred_fallthru
    _
  // Predicated region
  $region22: #{meta_net_forward.1} parent=0 // pred_check
    _
  $region23: #{meta_net_forward.1} parent=0 // pred_check_branch
    %23 = sbr.rel (0) target = $region25
  $region24: #{meta_net_forward.1} parent=0 // pred_region
    _
  $region25: #{meta_net_forward.1} parent=0 // pred_fallthru
    _
  // Predicated region
  $region26: #{meta_net_forward.1} parent=0 // pred_check
    _
  $region27: #{meta_net_forward.1} parent=0 // pred_check_branch
    %25 = sbr.rel (0) target = $region29
  $region28: #{meta_net_forward.1} parent=0 // pred_region
    _
  $region29: #{meta_net_forward.1} parent=0 // pred_fallthru
    _
  %v27 = vld [vmem:[%s0] sm:$0xff]
  %v28 = vld [vmem:[%s0 + $0x8] sm:$0xff]
  %v29 = vld [vmem:[%s0 + $0x10] sm:$0xff]
  %v30 = vld [vmem:[%s0 + $0x18] sm:$0xff]
  %v31 = vld [vmem:[%s0 + $0x20] sm:$0xff]
  %v32 = vld [vmem:[%s0 + $0x28] sm:$0xff]
  %v33 = vld [vmem:[%s0 + $0x30] sm:$0xff]
  %v34 = vld [vmem:[%s0 + $0x38] sm:$0xff]
  %v35 = vld [vmem:[%s0 + $0x40] sm:$0xff]
  %v36 = vld [vmem:[%s0 + $0x48] sm:$0xff]
  %v37 = vld [vmem:[%s0 + $0x50] sm:$0xff]
  %v38 = vld [vmem:[%s0 + $0x58] sm:$0xff]
  %v39 = vld [vmem:[%s0 + $0x60] sm:$0xff]
  %v40 = vld [vmem:[%s0 + $0x68] sm:$0xff]
  %v41 = vld [vmem:[%s0 + $0x70] sm:$0xff]
  %v42 = vld [vmem:[%s0 + $0x78] sm:$0xff]
  %43 = vxpose.xlu0.b32.start [1/16] %v27, 128
  %44 = vxpose.xlu0.b32.cont [2/16] %v28, 128
  %45 = vxpose.xlu0.b32.cont [3/16] %v29, 128
  %46 = vxpose.xlu0.b32.cont [4/16] %v30, 128
  %47 = vxpose.xlu0.b32.cont [5/16] %v31, 128
  %48 = vxpose.xlu0.b32.cont [6/16] %v32, 128
  %49 = vxpose.xlu0.b32.cont [7/16] %v33, 128
  %50 = vxpose.xlu0.b32.cont [8/16] %v34, 128
  %51 = vxpose.xlu0.b32.cont [9/16] %v35, 128
  %52 = vxpose.xlu0.b32.cont [10/16] %v36, 128
  %53 = vxpose.xlu0.b32.cont [11/16] %v37, 128
  %54 = vxpose.xlu0.b32.cont [12/16] %v38, 128
  %55 = vxpose.xlu0.b32.cont [13/16] %v39, 128
  %56 = vxpose.xlu0.b32.cont [14/16] %v40, 128
  %57 = vxpose.xlu0.b32.cont [15/16] %v41, 128
  %58 = vxpose.xlu0.b32.end [16/16] %v42, 128
  %v59 = vpop.trf.xlu0
  %v60 = vpop.trf.xlu0
  %v61 = vpop.trf.xlu0
  %v62 = vpop.trf.xlu0
  %v63 = vpop.trf.xlu0
  %v64 = vpop.trf.xlu0
  %v65 = vpop.trf.xlu0
  %v66 = vpop.trf.xlu0
  %v67 = vpop.trf.xlu0
  %v68 = vpop.trf.xlu0
  %v69 = vpop.trf.xlu0
  %v70 = vpop.trf.xlu0
  %v71 = vpop.trf.xlu0
  %v72 = vpop.trf.xlu0
  %v73 = vpop.trf.xlu0
  %v74 = vpop.trf.xlu0
  %v75 = vpack.c.bf16 %v60, %v59
  %v76 = vpack.c.bf16 %v62, %v61
  %v77 = vpack.c.bf16 %v63, %v63
  %v78 = vld [vmem:[%s1] sm:$0xf]
  %v79 = vld [vmem:[%s1 + $0x4] sm:$0xf]
  %v80 = vld [vmem:[%s1 + $0x8] sm:$0xf]
  %v81 = vld [vmem:[%s1 + $0xc] sm:$0xf]
  %v82 = vld [vmem:[%s1 + $0x10] sm:$0xf]
  %v83 = vld [vmem:[%s1 + $0x14] sm:$0xf]
  %v84 = vld [vmem:[%s1 + $0x18] sm:$0xf]
  %v85 = vld [vmem:[%s1 + $0x1c] sm:$0xf]
  %v86 = vld [vmem:[%s1 + $0x20] sm:$0xf]
  %v87 = vld [vmem:[%s1 + $0x24] sm:$0xf]
  %v88 = vld [vmem:[%s1 + $0x28] sm:$0xf]
  %v89 = vld [vmem:[%s1 + $0x2c] sm:$0xf]
  %v90 = vld [vmem:[%s1 + $0x30] sm:$0xf]
  %v91 = vld [vmem:[%s1 + $0x34] sm:$0xf]
  %v92 = vld [vmem:[%s1 + $0x38] sm:$0xf]
  %v93 = vld [vmem:[%s1 + $0x3c] sm:$0xf]
  %v94 = vld [vmem:[%s1 + $0x40] sm:$0xf]
  %v95 = vld [vmem:[%s1 + $0x44] sm:$0xf]
  %v96 = vld [vmem:[%s1 + $0x48] sm:$0xf]
  %v97 = vld [vmem:[%s1 + $0x4c] sm:$0xf]
  %v98 = vld [vmem:[%s1 + $0x50] sm:$0xf]
  %v99 = vld [vmem:[%s1 + $0x54] sm:$0xf]
  %v100 = vld [vmem:[%s1 + $0x58] sm:$0xf]
  %v101 = vld [vmem:[%s1 + $0x5c] sm:$0xf]
  %v102 = vld [vmem:[%s1 + $0x60] sm:$0xf]
  %v103 = vld [vmem:[%s1 + $0x64] sm:$0xf]
  %v104 = vld [vmem:[%s1 + $0x68] sm:$0xf]
  %v105 = vld [vmem:[%s1 + $0x6c] sm:$0xf]
  %v106 = vld [vmem:[%s1 + $0x70] sm:$0xf]
  %v107 = vld [vmem:[%s1 + $0x74] sm:$0xf]
  %v108 = vld [vmem:[%s1 + $0x78] sm:$0xf]
  %v109 = vld [vmem:[%s1 + $0x7c] sm:$0xf]
  %v110 = vld [vmem:[%s2] sm:$0xff]
  %v111 = vld [vmem:[%s2 + $0x8] sm:$0xff]
  %v112 = vld [vmem:[%s2 + $0x10] sm:$0xff]
  %v113 = vld [vmem:[%s2 + $0x18] sm:$0xff]
  %v114 = vld [vmem:[%s2 + $0x20] sm:$0xff]
  %v115 = vld [vmem:[%s2 + $0x28] sm:$0xff]
  %v116 = vld [vmem:[%s2 + $0x30] sm:$0xff]
  %v117 = vld [vmem:[%s2 + $0x38] sm:$0xff]
  %v118 = vld [vmem:[%s2 + $0x40] sm:$0xff]
  %v119 = vld [vmem:[%s2 + $0x48] sm:$0xff]
  %v120 = vld [vmem:[%s2 + $0x50] sm:$0xff]
  %v121 = vld [vmem:[%s2 + $0x58] sm:$0xff]
  %v122 = vld [vmem:[%s2 + $0x60] sm:$0xff]
  %v123 = vld [vmem:[%s2 + $0x68] sm:$0xff]
  %v124 = vld [vmem:[%s2 + $0x70] sm:$0xff]
  %v125 = vld [vmem:[%s2 + $0x78] sm:$0xff]
  %v126 = vld [vmem:[%s2 + $0x80] sm:$0xff]
  %v127 = vld [vmem:[%s2 + $0x88] sm:$0xff]
  %v128 = vld [vmem:[%s2 + $0x90] sm:$0xff]
  %v129 = vld [vmem:[%s2 + $0x98] sm:$0xff]
  %v130 = vld [vmem:[%s2 + $0xa0] sm:$0xff]
  %v131 = vld [vmem:[%s2 + $0xa8] sm:$0xff]
  %v132 = vld [vmem:[%s2 + $0xb0] sm:$0xff]
  %v133 = vld [vmem:[%s2 + $0xb8] sm:$0xff]
  %v134 = vld [vmem:[%s2 + $0xc0] sm:$0xff]
  %v135 = vld [vmem:[%s2 + $0xc8] sm:$0xff]
  %v136 = vld [vmem:[%s2 + $0xd0] sm:$0xff]
  %v137 = vld [vmem:[%s2 + $0xd8] sm:$0xff]
  %v138 = vld [vmem:[%s2 + $0xe0] sm:$0xff]
  %v139 = vld [vmem:[%s2 + $0xe8] sm:$0xff]
  %v140 = vld [vmem:[%s2 + $0xf0] sm:$0xff]
  %v141 = vld [vmem:[%s2 + $0xf8] sm:$0xff]
  %143 = vset.pattern.permute.xlu0 0
  %144 = vperm.xlu0 %143, %v110
  %v145 = vpop.permute.xlu0 %144
  %148 = vset.pattern.permute.xlu0 0
  %149 = vperm.xlu0 %148, %v111
  %v150 = vpop.permute.xlu0 %149
  %153 = vset.pattern.permute.xlu0 0
  %154 = vperm.xlu0 %153, %v112
  %v155 = vpop.permute.xlu0 %154
  %158 = vset.pattern.permute.xlu0 0
  %159 = vperm.xlu0 %158, %v113
  %v160 = vpop.permute.xlu0 %159
  %163 = vset.pattern.permute.xlu0 0
  %164 = vperm.xlu0 %163, %v114
  %v165 = vpop.permute.xlu0 %164
  %168 = vset.pattern.permute.xlu0 0
  %169 = vperm.xlu0 %168, %v115
  %v170 = vpop.permute.xlu0 %169
  %173 = vset.pattern.permute.xlu0 0
  %174 = vperm.xlu0 %173, %v116
  %v175 = vpop.permute.xlu0 %174
  %178 = vset.pattern.permute.xlu0 0
  %179 = vperm.xlu0 %178, %v117
  %v180 = vpop.permute.xlu0 %179
  %183 = vset.pattern.permute.xlu0 0
  %184 = vperm.xlu0 %183, %v118
  %v185 = vpop.permute.xlu0 %184
  %188 = vset.pattern.permute.xlu0 0
  %189 = vperm.xlu0 %188, %v119
  %v190 = vpop.permute.xlu0 %189
  %193 = vset.pattern.permute.xlu0 0
  %194 = vperm.xlu0 %193, %v120
  %v195 = vpop.permute.xlu0 %194
  %198 = vset.pattern.permute.xlu0 0
  %199 = vperm.xlu0 %198, %v121
  %v200 = vpop.permute.xlu0 %199
  %203 = vset.pattern.permute.xlu0 0
  %204 = vperm.xlu0 %203, %v122
  %v205 = vpop.permute.xlu0 %204
  %208 = vset.pattern.permute.xlu0 0
  %209 = vperm.xlu0 %208, %v123
  %v210 = vpop.permute.xlu0 %209
  %213 = vset.pattern.permute.xlu0 0
  %214 = vperm.xlu0 %213, %v124
  %v215 = vpop.permute.xlu0 %214
  %218 = vset.pattern.permute.xlu0 0
  %219 = vperm.xlu0 %218, %v125
  %v220 = vpop.permute.xlu0 %219
  %223 = vset.pattern.permute.xlu0 0
  %224 = vperm.xlu0 %223, %v126
  %v225 = vpop.permute.xlu0 %224
  %228 = vset.pattern.permute.xlu0 0
  %229 = vperm.xlu0 %228, %v127
  %v230 = vpop.permute.xlu0 %229
  %233 = vset.pattern.permute.xlu0 0
  %234 = vperm.xlu0 %233, %v128
  %v235 = vpop.permute.xlu0 %234
  %238 = vset.pattern.permute.xlu0 0
  %239 = vperm.xlu0 %238, %v129
  %v240 = vpop.permute.xlu0 %239
  %243 = vset.pattern.permute.xlu0 0
  %244 = vperm.xlu0 %243, %v130
  %v245 = vpop.permute.xlu0 %244
  %248 = vset.pattern.permute.xlu0 0
  %249 = vperm.xlu0 %248, %v131
  %v250 = vpop.permute.xlu0 %249
  %253 = vset.pattern.permute.xlu0 0
  %254 = vperm.xlu0 %253, %v132
  %v255 = vpop.permute.xlu0 %254
  %258 = vset.pattern.permute.xlu0 0
  %259 = vperm.xlu0 %258, %v133
  %v260 = vpop.permute.xlu0 %259
  %263 = vset.pattern.permute.xlu0 0
  %264 = vperm.xlu0 %263, %v134
  %v265 = vpop.permute.xlu0 %264
  %268 = vset.pattern.permute.xlu0 0
  %269 = vperm.xlu0 %268, %v135
  %v270 = vpop.permute.xlu0 %269
  %273 = vset.pattern.permute.xlu0 0
  %274 = vperm.xlu0 %273, %v136
  %v275 = vpop.permute.xlu0 %274
  %278 = vset.pattern.permute.xlu0 0
  %279 = vperm.xlu0 %278, %v137
  %v280 = vpop.permute.xlu0 %279
  %283 = vset.pattern.permute.xlu0 0
  %284 = vperm.xlu0 %283, %v138
  %v285 = vpop.permute.xlu0 %284
  %288 = vset.pattern.permute.xlu0 0
  %289 = vperm.xlu0 %288, %v139
  %v290 = vpop.permute.xlu0 %289
  %293 = vset.pattern.permute.xlu0 0
  %294 = vperm.xlu0 %293, %v140
  %v295 = vpop.permute.xlu0 %294
  %298 = vset.pattern.permute.xlu0 0
  %299 = vperm.xlu0 %298, %v141
  %v300 = vpop.permute.xlu0 %299
  %v334 = vunpack.c.l.b16 %v78
  %v335 = vunpack.c.l.b16 %v79
  %v336 = vunpack.c.l.b16 %v80
  %v337 = vunpack.c.l.b16 %v81
  %v338 = vunpack.c.l.b16 %v82
  %v339 = vunpack.c.l.b16 %v83
  %v340 = vunpack.c.l.b16 %v84
  %v341 = vunpack.c.l.b16 %v85
  %v342 = vunpack.c.l.b16 %v86
  %v343 = vunpack.c.l.b16 %v87
  %v344 = vunpack.c.l.b16 %v88
  %v345 = vunpack.c.l.b16 %v89
  %v346 = vunpack.c.l.b16 %v90
  %v347 = vunpack.c.l.b16 %v91
  %v348 = vunpack.c.l.b16 %v92
  %v349 = vunpack.c.l.b16 %v93
  %v350 = vunpack.c.l.b16 %v94
  %v351 = vunpack.c.l.b16 %v95
  %v352 = vunpack.c.l.b16 %v96
  %v353 = vunpack.c.l.b16 %v97
  %v354 = vunpack.c.l.b16 %v98
  %v355 = vunpack.c.l.b16 %v99
  %v356 = vunpack.c.l.b16 %v100
  %v357 = vunpack.c.l.b16 %v101
  %v358 = vunpack.c.l.b16 %v102
  %v359 = vunpack.c.l.b16 %v103
  %v360 = vunpack.c.l.b16 %v104
  %v361 = vunpack.c.l.b16 %v105
  %v362 = vunpack.c.l.b16 %v106
  %v363 = vunpack.c.l.b16 %v107
  %v364 = vunpack.c.l.b16 %v108
  %v365 = vunpack.c.l.b16 %v109
  %v366 = vpack.c.b16 %v335, %v334
  %v367 = vpack.c.b16 %v337, %v336
  %v368 = vpack.c.b16 %v339, %v338
  %v369 = vpack.c.b16 %v341, %v340
  %v370 = vpack.c.b16 %v343, %v342
  %v371 = vpack.c.b16 %v345, %v344
  %v372 = vpack.c.b16 %v347, %v346
  %v373 = vpack.c.b16 %v349, %v348
  %v374 = vpack.c.b16 %v351, %v350
  %v375 = vpack.c.b16 %v353, %v352
  %v376 = vpack.c.b16 %v355, %v354
  %v377 = vpack.c.b16 %v357, %v356
  %v378 = vpack.c.b16 %v359, %v358
  %v379 = vpack.c.b16 %v361, %v360
  %v380 = vpack.c.b16 %v363, %v362
  %v381 = vpack.c.b16 %v365, %v364
  %vm382 = vcmask 326656
  %v384 = vsel %vm382, %v366, 0
  %v387 = vsel %vm382, %v367, 0
  %v390 = vsel %vm382, %v368, 0
  %v393 = vsel %vm382, %v369, 0
  %v396 = vsel %vm382, %v370, 0
  %v399 = vsel %vm382, %v371, 0
  %v402 = vsel %vm382, %v372, 0
  %v405 = vsel %vm382, %v373, 0
  %v408 = vsel %vm382, %v374, 0
  %v411 = vsel %vm382, %v375, 0
  %v414 = vsel %vm382, %v376, 0
  %v417 = vsel %vm382, %v377, 0
  %v420 = vsel %vm382, %v378, 0
  %v423 = vsel %vm382, %v379, 0
  %v426 = vsel %vm382, %v380, 0
  %v429 = vsel %vm382, %v381, 0
  %vm431 = vcmask 1043456
  %v433 = vsel %vm431, %v77, 0
  %435 = vmatprep.subr.bf16.mxu0 0
  %436 = vmatpush1.bf16.msra.mxu0 %v75
  %437 = vmatprep.subr.bf16.mxu0 0
  %438 = vmatpush1.bf16.msra.mxu0 %v76
  %439 = vmatprep.subr.bf16.mxu0 0
  %440 = vmatpush1.bf16.msra.mxu0 %v433
  %441 = vmatprep.subr.bf16.mxu0 0
  %442 = vmatpush1.bf16.msra.mxu0 0
  %443 = vmatprep.subr.bf16.mxu0 0
  %444 = vmatpush1.bf16.msra.mxu0 0
  %445 = vmatprep.subr.bf16.mxu0 0
  %446 = vmatpush1.bf16.msra.mxu0 0
  %447 = vmatprep.subr.bf16.mxu0 0
  %448 = vmatpush1.bf16.msra.mxu0 0
  %449 = vmatprep.subr.bf16.mxu0 0
  %450 = vmatpush1.bf16.msra.mxu0 0
  %451 = vmatprep.subr.bf16.mxu0 0
  %452 = vmatpush1.bf16.msra.mxu0 0
  %453 = vmatprep.subr.bf16.mxu0 0
  %454 = vmatpush1.bf16.msra.mxu0 0
  %455 = vmatprep.subr.bf16.mxu0 0
  %456 = vmatpush1.bf16.msra.mxu0 0
  %457 = vmatprep.subr.bf16.mxu0 0
  %458 = vmatpush1.bf16.msra.mxu0 0
  %459 = vmatprep.subr.bf16.mxu0 0
  %460 = vmatpush1.bf16.msra.mxu0 0
  %461 = vmatprep.subr.bf16.mxu0 0
  %462 = vmatpush1.bf16.msra.mxu0 0
  %463 = vmatprep.subr.bf16.mxu0 0
  %464 = vmatpush1.bf16.msra.mxu0 0
  %465 = vmatprep.subr.bf16.mxu0 0
  %466 = vmatpush1.bf16.msra.mxu0 0
  %467 = vmatprep.mubr.bf16.mxu0 0
  %468 = vmatmul.mubr.bf16.gmra.mrb[0].mxu0 %v384
  %v469 = vpop.f32.mrb[0].mxu0
  %v470 = vadd.f32 %v145, %v469
  %v471 = vpop.f32.mrb[0].mxu0
  %v472 = vpop.f32.mrb[0].mxu0
  %v473 = vadd.f32 %v150, %v472
  %v474 = vpop.f32.mrb[0].mxu0
  %475 = vmatprep.mubr.bf16.mxu0 0
  %476 = vmatmul.mubr.bf16.gmra.mrb[0].mxu0 %v387
  %v477 = vpop.f32.mrb[0].mxu0
  %v478 = vadd.f32 %v155, %v477
  %v479 = vpop.f32.mrb[0].mxu0
  %v480 = vpop.f32.mrb[0].mxu0
  %v481 = vadd.f32 %v160, %v480
  %v482 = vpop.f32.mrb[0].mxu0
  %483 = vmatprep.mubr.bf16.mxu0 0
  %484 = vmatmul.mubr.bf16.gmra.mrb[0].mxu0 %v390
  %v485 = vpop.f32.mrb[0].mxu0
  %v486 = vadd.f32 %v165, %v485
  %v487 = vpop.f32.mrb[0].mxu0
  %v488 = vpop.f32.mrb[0].mxu0
  %v489 = vadd.f32 %v170, %v488
  %v490 = vpop.f32.mrb[0].mxu0
  %491 = vmatprep.mubr.bf16.mxu0 0
  %492 = vmatmul.mubr.bf16.gmra.mrb[0].mxu0 %v393
  %v493 = vpop.f32.mrb[0].mxu0
  %v494 = vadd.f32 %v175, %v493
  %v495 = vpop.f32.mrb[0].mxu0
  %v496 = vpop.f32.mrb[0].mxu0
  %v497 = vadd.f32 %v180, %v496
  %v498 = vpop.f32.mrb[0].mxu0
  %499 = vmatprep.mubr.bf16.mxu0 0
  %500 = vmatmul.mubr.bf16.gmra.mrb[0].mxu0 %v396
  %v501 = vpop.f32.mrb[0].mxu0
  %v502 = vadd.f32 %v185, %v501
  %v503 = vpop.f32.mrb[0].mxu0
  %v504 = vpop.f32.mrb[0].mxu0
  %v505 = vadd.f32 %v190, %v504
  %v506 = vpop.f32.mrb[0].mxu0
  %507 = vmatprep.mubr.bf16.mxu0 0
  %508 = vmatmul.mubr.bf16.gmra.mrb[0].mxu0 %v399
  %v509 = vpop.f32.mrb[0].mxu0
  %v510 = vadd.f32 %v195, %v509
  %v511 = vpop.f32.mrb[0].mxu0
  %v512 = vpop.f32.mrb[0].mxu0
  %v513 = vadd.f32 %v200, %v512
  %v514 = vpop.f32.mrb[0].mxu0
  %515 = vmatprep.mubr.bf16.mxu0 0
  %516 = vmatmul.mubr.bf16.gmra.mrb[0].mxu0 %v402
  %v517 = vpop.f32.mrb[0].mxu0
  %v518 = vadd.f32 %v205, %v517
  %v519 = vpop.f32.mrb[0].mxu0
  %v520 = vpop.f32.mrb[0].mxu0
  %v521 = vadd.f32 %v210, %v520
  %v522 = vpop.f32.mrb[0].mxu0
  %523 = vmatprep.mubr.bf16.mxu0 0
  %524 = vmatmul.mubr.bf16.gmra.mrb[0].mxu0 %v405
  %v525 = vpop.f32.mrb[0].mxu0
  %v526 = vadd.f32 %v215, %v525
  %v527 = vpop.f32.mrb[0].mxu0
  %v528 = vpop.f32.mrb[0].mxu0
  %v529 = vadd.f32 %v220, %v528
  %v530 = vpop.f32.mrb[0].mxu0
  %531 = vmatprep.mubr.bf16.mxu0 0
  %532 = vmatmul.mubr.bf16.gmra.mrb[0].mxu0 %v408
  %v533 = vpop.f32.mrb[0].mxu0
  %v534 = vadd.f32 %v225, %v533
  %v535 = vpop.f32.mrb[0].mxu0
  %v536 = vpop.f32.mrb[0].mxu0
  %v537 = vadd.f32 %v230, %v536
  %v538 = vpop.f32.mrb[0].mxu0
  %539 = vmatprep.mubr.bf16.mxu0 0
  %540 = vmatmul.mubr.bf16.gmra.mrb[0].mxu0 %v411
  %v541 = vpop.f32.mrb[0].mxu0
  %v542 = vadd.f32 %v235, %v541
  %v543 = vpop.f32.mrb[0].mxu0
  %v544 = vpop.f32.mrb[0].mxu0
  %v545 = vadd.f32 %v240, %v544
  %v546 = vpop.f32.mrb[0].mxu0
  %547 = vmatprep.mubr.bf16.mxu0 0
  %548 = vmatmul.mubr.bf16.gmra.mrb[0].mxu0 %v414
  %v549 = vpop.f32.mrb[0].mxu0
  %v550 = vadd.f32 %v245, %v549
  %v551 = vpop.f32.mrb[0].mxu0
  %v552 = vpop.f32.mrb[0].mxu0
  %v553 = vadd.f32 %v250, %v552
  %v554 = vpop.f32.mrb[0].mxu0
  %555 = vmatprep.mubr.bf16.mxu0 0
  %556 = vmatmul.mubr.bf16.gmra.mrb[0].mxu0 %v417
  %v557 = vpop.f32.mrb[0].mxu0
  %v558 = vadd.f32 %v255, %v557
  %v559 = vpop.f32.mrb[0].mxu0
  %v560 = vpop.f32.mrb[0].mxu0
  %v561 = vadd.f32 %v260, %v560
  %v562 = vpop.f32.mrb[0].mxu0
  %563 = vmatprep.mubr.bf16.mxu0 0
  %564 = vmatmul.mubr.bf16.gmra.mrb[0].mxu0 %v420
  %v565 = vpop.f32.mrb[0].mxu0
  %v566 = vadd.f32 %v265, %v565
  %v567 = vpop.f32.mrb[0].mxu0
  %v568 = vpop.f32.mrb[0].mxu0
  %v569 = vadd.f32 %v270, %v568
  %v570 = vpop.f32.mrb[0].mxu0
  %571 = vmatprep.mubr.bf16.mxu0 0
  %572 = vmatmul.mubr.bf16.gmra.mrb[0].mxu0 %v423
  %v573 = vpop.f32.mrb[0].mxu0
  %v574 = vadd.f32 %v275, %v573
  %v575 = vpop.f32.mrb[0].mxu0
  %v576 = vpop.f32.mrb[0].mxu0
  %v577 = vadd.f32 %v280, %v576
  %v578 = vpop.f32.mrb[0].mxu0
  %579 = vmatprep.mubr.bf16.mxu0 0
  %580 = vmatmul.mubr.bf16.gmra.mrb[0].mxu0 %v426
  %v581 = vpop.f32.mrb[0].mxu0
  %v582 = vadd.f32 %v285, %v581
  %v583 = vpop.f32.mrb[0].mxu0
  %v584 = vpop.f32.mrb[0].mxu0
  %v585 = vadd.f32 %v290, %v584
  %v586 = vpop.f32.mrb[0].mxu0
  %587 = vmatprep.mubr.bf16.mxu0 0
  %588 = vmatmul.mubr.bf16.gmra.mrb[0].mxu0 %v429
  %v589 = vpop.f32.mrb[0].mxu0
  %v590 = vadd.f32 %v295, %v589
  %v591 = vpop.f32.mrb[0].mxu0
  %v592 = vpop.f32.mrb[0].mxu0
  %v593 = vadd.f32 %v300, %v592
  %v594 = vpop.f32.mrb[0].mxu0
  %595 = vdwg.mxu0
  %v596 = vpack.c.bf16 %v473, %v470
  %v597 = vpack.c.bf16 %v481, %v478
  %v598 = vpack.c.bf16 %v489, %v486
  %v599 = vpack.c.bf16 %v497, %v494
  %v600 = vpack.c.bf16 %v505, %v502
  %v601 = vpack.c.bf16 %v513, %v510
  %v602 = vpack.c.bf16 %v521, %v518
  %v603 = vpack.c.bf16 %v529, %v526
  %v604 = vpack.c.bf16 %v537, %v534
  %v605 = vpack.c.bf16 %v545, %v542
  %v606 = vpack.c.bf16 %v553, %v550
  %v607 = vpack.c.bf16 %v561, %v558
  %v608 = vpack.c.bf16 %v569, %v566
  %v609 = vpack.c.bf16 %v577, %v574
  %v610 = vpack.c.bf16 %v585, %v582
  %v611 = vpack.c.bf16 %v593, %v590
  %v612 = vtanh.bf16.pop %v596
  %v613 = vtanh.bf16.pop %v597
  %v614 = vtanh.bf16.pop %v598
  %v615 = vtanh.bf16.pop %v599
  %v616 = vtanh.bf16.pop %v600
  %v617 = vtanh.bf16.pop %v601
  %v618 = vtanh.bf16.pop %v602
  %v619 = vtanh.bf16.pop %v603
  %v620 = vtanh.bf16.pop %v604
  %v621 = vtanh.bf16.pop %v605
  %v622 = vtanh.bf16.pop %v606
  %v623 = vtanh.bf16.pop %v607
  %v624 = vtanh.bf16.pop %v608
  %v625 = vtanh.bf16.pop %v609
  %v626 = vtanh.bf16.pop %v610
  %v627 = vtanh.bf16.pop %v611
  %v628 = vld [vmem:[%s3] sm:$0xff]
  %v629 = vld [vmem:[%s3 + $0x8] sm:$0xff]
  %v630 = vld [vmem:[%s3 + $0x10] sm:$0xff]
  %v631 = vld [vmem:[%s3 + $0x18] sm:$0xff]
  %v632 = vld [vmem:[%s3 + $0x20] sm:$0xff]
  %v633 = vld [vmem:[%s3 + $0x28] sm:$0xff]
  %v634 = vld [vmem:[%s3 + $0x30] sm:$0xff]
  %v635 = vld [vmem:[%s3 + $0x38] sm:$0xff]
  %v636 = vld [vmem:[%s3 + $0x40] sm:$0xff]
  %v637 = vld [vmem:[%s3 + $0x48] sm:$0xff]
  %v638 = vld [vmem:[%s3 + $0x50] sm:$0xff]
  %v639 = vld [vmem:[%s3 + $0x58] sm:$0xff]
  %v640 = vld [vmem:[%s3 + $0x60] sm:$0xff]
  %v641 = vld [vmem:[%s3 + $0x68] sm:$0xff]
  %v642 = vld [vmem:[%s4] sm:$0xff]
  %v643 = vld [vmem:[%s4 + $0x8] sm:$0xff]
  %v644 = vld [vmem:[%s4 + $0x10] sm:$0xff]
  %v645 = vld [vmem:[%s4 + $0x18] sm:$0xff]
  %v646 = vld [vmem:[%s4 + $0x20] sm:$0xff]
  %v647 = vld [vmem:[%s4 + $0x28] sm:$0xff]
  %v648 = vld [vmem:[%s4 + $0x30] sm:$0xff]
  %v649 = vld [vmem:[%s4 + $0x38] sm:$0xff]
  %v650 = vld [vmem:[%s4 + $0x40] sm:$0xff]
  %v651 = vld [vmem:[%s4 + $0x48] sm:$0xff]
  %v652 = vld [vmem:[%s4 + $0x50] sm:$0xff]
  %v653 = vld [vmem:[%s4 + $0x58] sm:$0xff]
  %v654 = vld [vmem:[%s4 + $0x60] sm:$0xff]
  %v655 = vld [vmem:[%s4 + $0x68] sm:$0xff]
  %657 = vset.pattern.permute.xlu0 0
  %658 = vperm.xlu0 %657, %v642
  %v659 = vpop.permute.xlu0 %658
  %662 = vset.pattern.permute.xlu0 0
  %663 = vperm.xlu0 %662, %v643
  %v664 = vpop.permute.xlu0 %663
  %667 = vset.pattern.permute.xlu0 0
  %668 = vperm.xlu0 %667, %v644
  %v669 = vpop.permute.xlu0 %668
  %672 = vset.pattern.permute.xlu0 0
  %673 = vperm.xlu0 %672, %v645
  %v674 = vpop.permute.xlu0 %673
  %677 = vset.pattern.permute.xlu0 0
  %678 = vperm.xlu0 %677, %v646
  %v679 = vpop.permute.xlu0 %678
  %682 = vset.pattern.permute.xlu0 0
  %683 = vperm.xlu0 %682, %v647
  %v684 = vpop.permute.xlu0 %683
  %687 = vset.pattern.permute.xlu0 0
  %688 = vperm.xlu0 %687, %v648
  %v689 = vpop.permute.xlu0 %688
  %692 = vset.pattern.permute.xlu0 0
  %693 = vperm.xlu0 %692, %v649
  %v694 = vpop.permute.xlu0 %693
  %697 = vset.pattern.permute.xlu0 0
  %698 = vperm.xlu0 %697, %v650
  %v699 = vpop.permute.xlu0 %698
  %702 = vset.pattern.permute.xlu0 0
  %703 = vperm.xlu0 %702, %v651
  %v704 = vpop.permute.xlu0 %703
  %707 = vset.pattern.permute.xlu0 0
  %708 = vperm.xlu0 %707, %v652
  %v709 = vpop.permute.xlu0 %708
  %712 = vset.pattern.permute.xlu0 0
  %713 = vperm.xlu0 %712, %v653
  %v714 = vpop.permute.xlu0 %713
  %717 = vset.pattern.permute.xlu0 0
  %718 = vperm.xlu0 %717, %v654
  %v719 = vpop.permute.xlu0 %718
  %722 = vset.pattern.permute.xlu0 0
  %723 = vperm.xlu0 %722, %v655
  %v724 = vpop.permute.xlu0 %723
  %v740 = vunpack.c.l.b16 %v628
  %v741 = vunpack.c.h.b16 %v628
  %v742 = vunpack.c.l.b16 %v629
  %v743 = vunpack.c.h.b16 %v629
  %v744 = vunpack.c.l.b16 %v630
  %v745 = vunpack.c.h.b16 %v630
  %v746 = vunpack.c.l.b16 %v631
  %v747 = vunpack.c.h.b16 %v631
  %v748 = vunpack.c.l.b16 %v632
  %v749 = vunpack.c.h.b16 %v632
  %v750 = vunpack.c.l.b16 %v633
  %v751 = vunpack.c.h.b16 %v633
  %v752 = vunpack.c.l.b16 %v634
  %v753 = vunpack.c.h.b16 %v634
  %v754 = vunpack.c.l.b16 %v635
  %v755 = vunpack.c.h.b16 %v635
  %v756 = vunpack.c.l.b16 %v636
  %v757 = vunpack.c.h.b16 %v636
  %v758 = vunpack.c.l.b16 %v637
  %v759 = vunpack.c.h.b16 %v637
  %v760 = vunpack.c.l.b16 %v638
  %v761 = vunpack.c.h.b16 %v638
  %v762 = vunpack.c.l.b16 %v639
  %v763 = vunpack.c.h.b16 %v639
  %v764 = vunpack.c.l.b16 %v640
  %v765 = vunpack.c.h.b16 %v640
  %v766 = vunpack.c.l.b16 %v641
  %v767 = vunpack.c.h.b16 %v641
  %v768 = vpack.c.b16 %v742, %v740
  %v769 = vpack.c.b16 %v743, %v741
  %v770 = vpack.c.b16 %v746, %v744
  %v771 = vpack.c.b16 %v747, %v745
  %v772 = vpack.c.b16 %v750, %v748
  %v773 = vpack.c.b16 %v751, %v749
  %v774 = vpack.c.b16 %v754, %v752
  %v775 = vpack.c.b16 %v755, %v753
  %v776 = vpack.c.b16 %v758, %v756
  %v777 = vpack.c.b16 %v759, %v757
  %v778 = vpack.c.b16 %v762, %v760
  %v779 = vpack.c.b16 %v763, %v761
  %v780 = vpack.c.b16 %v766, %v764
  %v781 = vpack.c.b16 %v767, %v765
  %796 = vmatprep.subr.bf16.mxu0 0
  %797 = vmatpush1.bf16.msra.mxu0 %v612
  %798 = vmatprep.subr.bf16.mxu0 0
  %799 = vmatpush1.bf16.msra.mxu0 %v613
  %800 = vmatprep.subr.bf16.mxu0 0
  %801 = vmatpush1.bf16.msra.mxu0 %v614
  %802 = vmatprep.subr.bf16.mxu0 0
  %803 = vmatpush1.bf16.msra.mxu0 %v615
  %804 = vmatprep.subr.bf16.mxu0 0
  %805 = vmatpush1.bf16.msra.mxu0 %v616
  %806 = vmatprep.subr.bf16.mxu0 0
  %807 = vmatpush1.bf16.msra.mxu0 %v617
  %808 = vmatprep.subr.bf16.mxu0 0
  %809 = vmatpush1.bf16.msra.mxu0 %v618
  %810 = vmatprep.subr.bf16.mxu0 0
  %811 = vmatpush1.bf16.msra.mxu0 %v619
  %812 = vmatprep.subr.bf16.mxu0 0
  %813 = vmatpush1.bf16.msra.mxu0 %v620
  %814 = vmatprep.subr.bf16.mxu0 0
  %815 = vmatpush1.bf16.msra.mxu0 %v621
  %816 = vmatprep.subr.bf16.mxu0 0
  %817 = vmatpush1.bf16.msra.mxu0 %v622
  %818 = vmatprep.subr.bf16.mxu0 0
  %819 = vmatpush1.bf16.msra.mxu0 %v623
  %820 = vmatprep.subr.bf16.mxu0 0
  %821 = vmatpush1.bf16.msra.mxu0 %v624
  %822 = vmatprep.subr.bf16.mxu0 0
  %823 = vmatpush1.bf16.msra.mxu0 %v625
  %824 = vmatprep.subr.bf16.mxu0 0
  %825 = vmatpush1.bf16.msra.mxu0 %v626
  %826 = vmatprep.subr.bf16.mxu0 0
  %827 = vmatpush1.bf16.msra.mxu0 %v627
  %828 = vmatprep.mubr.bf16.mxu0 %v769
  %829 = vmatmul.mubr.bf16.gmra.mrb[0].mxu0 %v768
  %v830 = vpop.f32.mrb[0].mxu0
  %v831 = vadd.f32 %v659, %v830
  %v832 = vpop.f32.mrb[0].mxu0
  %v833 = vpop.f32.mrb[0].mxu0
  %v834 = vadd.f32 %v664, %v833
  %v835 = vpop.f32.mrb[0].mxu0
  %836 = vmatprep.mubr.bf16.mxu0 %v771
  %837 = vmatmul.mubr.bf16.gmra.mrb[0].mxu0 %v770
  %v838 = vpop.f32.mrb[0].mxu0
  %v839 = vadd.f32 %v669, %v838
  %v840 = vpop.f32.mrb[0].mxu0
  %v841 = vpop.f32.mrb[0].mxu0
  %v842 = vadd.f32 %v674, %v841
  %v843 = vpop.f32.mrb[0].mxu0
  %844 = vmatprep.mubr.bf16.mxu0 %v773
  %845 = vmatmul.mubr.bf16.gmra.mrb[0].mxu0 %v772
  %v846 = vpop.f32.mrb[0].mxu0
  %v847 = vadd.f32 %v679, %v846
  %v848 = vpop.f32.mrb[0].mxu0
  %v849 = vpop.f32.mrb[0].mxu0
  %v850 = vadd.f32 %v684, %v849
  %v851 = vpop.f32.mrb[0].mxu0
  %852 = vmatprep.mubr.bf16.mxu0 %v775
  %853 = vmatmul.mubr.bf16.gmra.mrb[0].mxu0 %v774
  %v854 = vpop.f32.mrb[0].mxu0
  %v855 = vadd.f32 %v689, %v854
  %v856 = vpop.f32.mrb[0].mxu0
  %v857 = vpop.f32.mrb[0].mxu0
  %v858 = vadd.f32 %v694, %v857
  %v859 = vpop.f32.mrb[0].mxu0
  %860 = vmatprep.mubr.bf16.mxu0 %v777
  %861 = vmatmul.mubr.bf16.gmra.mrb[0].mxu0 %v776
  %v862 = vpop.f32.mrb[0].mxu0
  %v863 = vadd.f32 %v699, %v862
  %v864 = vpop.f32.mrb[0].mxu0
  %v865 = vpop.f32.mrb[0].mxu0
  %v866 = vadd.f32 %v704, %v865
  %v867 = vpop.f32.mrb[0].mxu0
  %868 = vmatprep.mubr.bf16.mxu0 %v779
  %869 = vmatmul.mubr.bf16.gmra.mrb[0].mxu0 %v778
  %v870 = vpop.f32.mrb[0].mxu0
  %v871 = vadd.f32 %v709, %v870
  %v872 = vpop.f32.mrb[0].mxu0
  %v873 = vpop.f32.mrb[0].mxu0
  %v874 = vadd.f32 %v714, %v873
  %v875 = vpop.f32.mrb[0].mxu0
  %876 = vmatprep.mubr.bf16.mxu0 %v781
  %877 = vmatmul.mubr.bf16.gmra.mrb[0].mxu0 %v780
  %v878 = vpop.f32.mrb[0].mxu0
  %v879 = vadd.f32 %v719, %v878
  %v880 = vpop.f32.mrb[0].mxu0
  %v881 = vpop.f32.mrb[0].mxu0
  %v882 = vadd.f32 %v724, %v881
  %v883 = vpop.f32.mrb[0].mxu0
  %884 = vdwg.mxu0
  %v885 = vpack.c.bf16 %v834, %v831
  %v886 = vpack.c.bf16 %v842, %v839
  %v887 = vpack.c.bf16 %v850, %v847
  %v888 = vpack.c.bf16 %v858, %v855
  %v889 = vpack.c.bf16 %v866, %v863
  %v890 = vpack.c.bf16 %v874, %v871
  %v891 = vpack.c.bf16 %v882, %v879
  %v892 = vtanh.bf16.pop %v885
  %v893 = vtanh.bf16.pop %v886
  %v894 = vtanh.bf16.pop %v887
  %v895 = vtanh.bf16.pop %v888
  %v896 = vtanh.bf16.pop %v889
  %v897 = vtanh.bf16.pop %v890
  %v898 = vtanh.bf16.pop %v891
  %v899 = vld [vmem:[%s5] sm:$0xf]
  %v900 = vld [vmem:[%s6] sm:$0xff]
  %902 = vset.pattern.permute.xlu0 0
  %903 = vperm.xlu0 %902, %v900
  %v904 = vpop.permute.xlu0 %903
  %vm906 = vcmask 916480
  %v908 = vsel %vm906, %v899, 0
  %910 = vmatprep.subr.bf16.mxu0 0
  %911 = vmatpush1.bf16.msra.mxu0 %v892
  %912 = vmatprep.subr.bf16.mxu0 0
  %913 = vmatpush1.bf16.msra.mxu0 %v893
  %914 = vmatprep.subr.bf16.mxu0 0
  %915 = vmatpush1.bf16.msra.mxu0 %v894
  %916 = vmatprep.subr.bf16.mxu0 0
  %917 = vmatpush1.bf16.msra.mxu0 %v895
  %918 = vmatprep.subr.bf16.mxu0 0
  %919 = vmatpush1.bf16.msra.mxu0 %v896
  %920 = vmatprep.subr.bf16.mxu0 0
  %921 = vmatpush1.bf16.msra.mxu0 %v897
  %922 = vmatprep.subr.bf16.mxu0 0
  %923 = vmatpush1.bf16.msra.mxu0 %v898
  %924 = vmatprep.subr.bf16.mxu0 0
  %925 = vmatpush1.bf16.msra.mxu0 0
  %926 = vmatprep.subr.bf16.mxu0 0
  %927 = vmatpush1.bf16.msra.mxu0 0
  %928 = vmatprep.subr.bf16.mxu0 0
  %929 = vmatpush1.bf16.msra.mxu0 0
  %930 = vmatprep.subr.bf16.mxu0 0
  %931 = vmatpush1.bf16.msra.mxu0 0
  %932 = vmatprep.subr.bf16.mxu0 0
  %933 = vmatpush1.bf16.msra.mxu0 0
  %934 = vmatprep.subr.bf16.mxu0 0
  %935 = vmatpush1.bf16.msra.mxu0 0
  %936 = vmatprep.subr.bf16.mxu0 0
  %937 = vmatpush1.bf16.msra.mxu0 0
  %938 = vmatprep.subr.bf16.mxu0 0
  %939 = vmatpush1.bf16.msra.mxu0 0
  %940 = vmatprep.subr.bf16.mxu0 0
  %941 = vmatpush1.bf16.msra.mxu0 0
  %942 = vmatprep.mubr.bf16.mxu0 0
  %943 = vmatmul.mubr.bf16.gmra.mrb[0].mxu0 %v908
  %v944 = vpop.f32.mrb[0].mxu0
  %v945 = vadd.f32 %v904, %v944
  %v946 = vpop.f32.mrb[0].mxu0
  %v947 = vpop.f32.mrb[0].mxu0
  %v948 = vpop.f32.mrb[0].mxu0
  %949 = vdwg.mxu0
  %950 = vst [vmem:[%s7] sm:$0xff] %v945
  // Predicated region
  $region30: #{meta_net_forward.1} parent=0 // pred_check
    _
  $region31: #{meta_net_forward.1} parent=0 // pred_check_branch
    %952 = sbr.rel (0) target = $region33
  $region32: #{meta_net_forward.1} parent=0 // pred_region
    _
  $region33: #{meta_net_forward.1} parent=0 // pred_fallthru
    _
  // Predicated region
  $region34: #{meta_net_forward.1} parent=0 // pred_check
    _
  $region35: #{meta_net_forward.1} parent=0 // pred_check_branch
    %954 = sbr.rel (0) target = $region37
  $region36: #{meta_net_forward.1} parent=0 // pred_region
    _
  $region37: #{meta_net_forward.1} parent=0 // pred_fallthru
    _

</llo_original>
